<compile_context>
chip_gen: v7x
topology: tpu7x:2x2x1
jax: 0.10.0
libtpu: 0.0.40
codegen_flags: <defaults>
</compile_context>

<pallas_src>
import jax
import jax.numpy as jnp
from jax.experimental import pallas as pl
from jax.experimental.pallas import tpu as pltpu

LANE = 128
_NEG_INF = -1e30


def _round_up(x, m):
    return ((x + m - 1) // m) * m


# ----------------------------------------------------------------------------
# Kernel
# ----------------------------------------------------------------------------
def _make_kernel(n_layers: int, action_dim: int, use_bf16: bool):
    """Fused actor+critic MLP, depth unrolled in Python."""

    def kernel(state_ref, action_ref, *rest):
        w_refs = rest[: 2 * n_layers]
        out_ref = rest[2 * n_layers]

        h = state_ref[...]                                   # (TB, state_dim) f32
        for li in range(n_layers):
            w = w_refs[2 * li][...]                          # (in, out_pad)
            b = w_refs[2 * li + 1][...]                      # (1, out_pad)
            if use_bf16:
                acc = jnp.dot(h.astype(jnp.bfloat16), w.astype(jnp.bfloat16),
                              preferred_element_type=jnp.float32)
            else:
                acc = jnp.dot(h, w, preferred_element_type=jnp.float32)
            h = acc + b
            if li < n_layers - 1:
                h = jnp.tanh(h)                              # padded lanes stay 0

        # h: (TB, OUT_PAD). lanes [0, action_dim) = actor logits,
        #                   lane  action_dim      = critic value, rest = 0.
        lane = jax.lax.broadcasted_iota(jnp.int32, h.shape, 1)
        value = jnp.sum(jnp.where(lane == action_dim, h, 0.0),
                        axis=-1, keepdims=True)

        # numerically-stable log-softmax over the real action lanes only
        logits = jnp.where(lane < action_dim, h, _NEG_INF)
        m = jnp.max(logits, axis=-1, keepdims=True)
        shifted = logits - m
        z = jnp.sum(jnp.exp(shifted), axis=-1, keepdims=True)
        log_probs = shifted - jnp.log(z)                     # masked lanes ~ -1e30
        probs = jnp.exp(log_probs)                           # masked lanes exactly 0

        # Categorical.log_prob(action) via one-hot mask; entropy = -sum p log p
        a = action_ref[...]                                  # (TB, 1) int32
        onehot = (lane == a).astype(jnp.float32)
        logp = jnp.sum(log_probs * onehot, axis=-1, keepdims=True)
        ent = -jnp.sum(probs * log_probs, axis=-1, keepdims=True)

        # lane-dense packed output slab: 0 -> log_prob, 1 -> value, 2 -> entropy
        out_ref[...] = jnp.where(lane == 0, logp,
                       jnp.where(lane == 1, value,
                       jnp.where(lane == 2, ent, 0.0)))

    return kernel


# ----------------------------------------------------------------------------
# Fused / lane-padded weight construction (done once, outside the hot loop)
# ----------------------------------------------------------------------------
def build_fused_params(actor_params, critic_params, state_dim, action_dim):
    """Fuse actor & critic Linear stacks into block-diagonal, 128-lane-padded
    weights. Layer i input layout:  [actor_hidden | critic_hidden | zero pad].
    Final layer output layout:      [logits (action_dim) | value | zero pad].
    """
    # TODO(synk): unequal actor/critic depths would need separate matmul stacks.
    assert len(actor_params) == len(critic_params), "fusion requires equal depth"
    n_layers = len(actor_params)
    a_dims = [state_dim] + [w.shape[1] for (w, _) in actor_params]
    c_dims = [state_dim] + [w.shape[1] for (w, _) in critic_params]

    fused = []
    out_w = None
    for li in range(n_layers):
        wa, ba = actor_params[li]
        wc, bc = critic_params[li]
        last = li == n_layers - 1

        if li == 0:
            in_w = state_dim                   # both nets read the same x
            a_in_off, c_in_off = 0, 0
        else:
            in_w = _round_up(a_dims[li] + c_dims[li], LANE)
            a_in_off, c_in_off = 0, a_dims[li]

        if last:
            out_w = _round_up(action_dim + 1, LANE)
            a_out_off, c_out_off = 0, action_dim
        else:
            out_w = _round_up(a_dims[li + 1] + c_dims[li + 1], LANE)
            a_out_off, c_out_off = 0, a_dims[li + 1]

        W = jnp.zeros((in_w, out_w), jnp.float32)
        W = W.at[a_in_off:a_in_off + wa.shape[0],
                 a_out_off:a_out_off + wa.shape[1]].set(wa)
        W = W.at[c_in_off:c_in_off + wc.shape[0],
                 c_out_off:c_out_off + wc.shape[1]].set(wc)
        B = jnp.zeros((1, out_w), jnp.float32)
        B = B.at[:, a_out_off:a_out_off + ba.shape[1]].set(ba)
        B = B.at[:, c_out_off:c_out_off + bc.shape[1]].set(bc)
        fused += [W, B]

    return fused, out_w


# ----------------------------------------------------------------------------
# Wrapper — Pallas equivalent of ActorCritic.evaluate(state, action)
# ----------------------------------------------------------------------------
def actor_critic_evaluate(state, action, actor_params, critic_params,
                          *, tile_b=512, use_bf16=True):
    """Returns (action_logprobs (B,), state_value (B,), dist_entropy (B,))."""
    B, state_dim = state.shape
    action_dim = actor_params[-1][0].shape[1]
    n_layers = len(actor_params)

    fused, out_pad = build_fused_params(actor_params, critic_params,
                                        state_dim, action_dim)

    # batch tiling: TILE_B rows per grid step (sublane-aligned), pad + slice
    tile_b = min(tile_b, _round_up(B, 8))
    b_pad = _round_up(B, tile_b)
    if b_pad != B:
        state = jnp.pad(state, ((0, b_pad - B), (0, 0)))
        action = jnp.pad(action, (0, b_pad - B))
    action2 = action.reshape(b_pad, 1).astype(jnp.int32)

    grid = (b_pad // tile_b,)

    in_specs = [
        pl.BlockSpec((tile_b, state_dim), lambda i: (i, 0)),   # state: batch-tiled
        pl.BlockSpec((tile_b, 1), lambda i: (i, 0)),           # action: batch-tiled
    ]
    # fused weights/biases: constant index map -> DMA'd once, VMEM-resident
    for arr in fused:
        in_specs.append(pl.BlockSpec(arr.shape, lambda i: (0, 0)))

    out_spec = pl.BlockSpec((tile_b, out_pad), lambda i: (i, 0))
    out_shape = jax.ShapeDtypeStruct((b_pad, out_pad), jnp.float32)

    kernel = _make_kernel(n_layers, action_dim, use_bf16)

    packed = pl.pallas_call(
        kernel,
        out_shape=out_shape,
        grid=grid,
        in_specs=in_specs,
        out_specs=out_spec,
        compiler_params=pltpu.CompilerParams(
            dimension_semantics=("parallel",)),
    )(state, action2, *fused)

    # unpack lane-dense slab; torch.squeeze(state_value) -> (B,)
    return packed[:B, 0], packed[:B, 1], packed[:B, 2]


# ----------------------------------------------------------------------------
# Deterministic parameter construction (mimics nn.Linear default init)
# ----------------------------------------------------------------------------
def _init_linear(key, fan_in, fan_out):
    kw, kb = jax.random.split(key)
    bound = 1.0 / jnp.sqrt(jnp.float32(fan_in))
    w = jax.random.uniform(kw, (fan_in, fan_out), jnp.float32, -bound, bound)
    b = jax.random.uniform(kb, (1, fan_out), jnp.float32, -bound, bound)
    return w, b


def build_params(key, state_dim, action_dim, actor_layer, critic_layer):
    actor_dims = [state_dim] + list(actor_layer) + [action_dim]
    critic_dims = [state_dim] + list(critic_layer) + [1]
    actor_params, critic_params = [], []
    for i in range(len(actor_dims) - 1):
        key, sub = jax.random.split(key)
        actor_params.append(_init_linear(sub, actor_dims[i], actor_dims[i + 1]))
    for i in range(len(critic_dims) - 1):
        key, sub = jax.random.split(key)
        critic_params.append(_init_linear(sub, critic_dims[i], critic_dims[i + 1]))
    return actor_params, critic_params


# ----------------------------------------------------------------------------
# Pure-JAX reference (same bf16-at-the-dot policy for a tight tolerance check)
# ----------------------------------------------------------------------------
def _reference_evaluate(state, action, actor_params, critic_params,
                        use_bf16=True):
    def mlp(x, params):
        h = x
        for i, (w, b) in enumerate(params):
            if use_bf16:
                h = jnp.dot(h.astype(jnp.bfloat16), w.astype(jnp.bfloat16),
                            preferred_element_type=jnp.float32) + b
            else:
                h = h @ w + b
            if i < len(params) - 1:
                h = jnp.tanh(h)
        return h

    logits = mlp(state, actor_params)
    log_probs = jax.nn.log_softmax(logits, axis=-1)
    probs = jnp.exp(log_probs)
    logp = jnp.take_along_axis(log_probs, action.reshape(-1, 1), axis=-1)[:, 0]
    ent = -jnp.sum(probs * log_probs, axis=-1)
    v = mlp(state, critic_params)
    return logp, v[:, 0], ent


# ----------------------------------------------------------------------------
if __name__ == "__main__":
    state_dim = 16
    action_dim = 4
    actor_layer = [32, 32]
    critic_layer = [32, 32]
    batch = 24

    key = jax.random.PRNGKey(0)
    kp, ks, ka = jax.random.split(key, 3)

    actor_params, critic_params = build_params(
        kp, state_dim, action_dim, actor_layer, critic_layer)

    state = jax.random.normal(ks, (batch, state_dim), jnp.float32)
    action = jax.random.randint(ka, (batch,), 0, action_dim, jnp.int32)

    # small demo batch: use tile_b=8 so the kernel exercises a multi-step
    # batch grid (real PPO updates should use the default tile_b=512 and call
    # this once over the whole rollout buffer).
    logp, value, entropy = actor_critic_evaluate(
        state, action, actor_params, critic_params, tile_b=8, use_bf16=True)
    jax.block_until_ready((logp, value, entropy))

    ref_logp, ref_value, ref_ent = _reference_evaluate(
        state, action, actor_params, critic_params, use_bf16=True)
    assert jnp.allclose(logp, ref_logp, atol=1e-3, rtol=1e-3)
    assert jnp.allclose(value, ref_value, atol=1e-3, rtol=1e-3)
    assert jnp.allclose(entropy, ref_ent, atol=1e-3, rtol=1e-3)

    print("KERNEL_OK")
</pallas_src>

<mosaic_0001>
module attributes {stable_mosaic.version = 11 : i64} {
  func.func @kernel(%arg0: i32, %arg1: memref<8x16xf32, #tpu.memory_space<vmem>>, %arg2: memref<8x1xi32, #tpu.memory_space<vmem>>, %arg3: memref<16x128xf32, #tpu.memory_space<vmem>>, %arg4: memref<1x128xf32, #tpu.memory_space<vmem>>, %arg5: memref<128x128xf32, #tpu.memory_space<vmem>>, %arg6: memref<1x128xf32, #tpu.memory_space<vmem>>, %arg7: memref<128x128xf32, #tpu.memory_space<vmem>>, %arg8: memref<1x128xf32, #tpu.memory_space<vmem>>, %arg9: memref<8x128xf32, #tpu.memory_space<vmem>>) attributes {dimension_semantics = [#tpu.dimension_semantics<parallel>], iteration_bounds = array<i64: 3>, scalar_prefetch = 0 : i64, scratch_operands = 0 : i64, tpu.core_type = #tpu.core_type<tc>, window_params = [{transform_indices = @transform_0, window_bounds = array<i64: 8, 16>}, {transform_indices = @transform_1, window_bounds = array<i64: 8, 1>}, {pipeline_mode = #tpu.pipeline_mode<synchronous>, transform_indices = @transform_2, window_bounds = array<i64: 16, 128>}, {pipeline_mode = #tpu.pipeline_mode<synchronous>, transform_indices = @transform_3, window_bounds = array<i64: 1, 128>}, {pipeline_mode = #tpu.pipeline_mode<synchronous>, transform_indices = @transform_4, window_bounds = array<i64: 128, 128>}, {pipeline_mode = #tpu.pipeline_mode<synchronous>, transform_indices = @transform_5, window_bounds = array<i64: 1, 128>}, {pipeline_mode = #tpu.pipeline_mode<synchronous>, transform_indices = @transform_6, window_bounds = array<i64: 128, 128>}, {pipeline_mode = #tpu.pipeline_mode<synchronous>, transform_indices = @transform_7, window_bounds = array<i64: 1, 128>}, {transform_indices = @transform_8, window_bounds = array<i64: 8, 128>}]} {
    %c0 = arith.constant 0 : index
    %c0_0 = arith.constant 0 : index
    %0 = vector.load %arg1[%c0, %c0_0] : memref<8x16xf32, #tpu.memory_space<vmem>>, vector<8x16xf32>
    %c0_1 = arith.constant 0 : index
    %c0_2 = arith.constant 0 : index
    %1 = vector.load %arg3[%c0_1, %c0_2] : memref<16x128xf32, #tpu.memory_space<vmem>>, vector<16x128xf32>
    %c0_3 = arith.constant 0 : index
    %c0_4 = arith.constant 0 : index
    %2 = vector.load %arg4[%c0_3, %c0_4] : memref<1x128xf32, #tpu.memory_space<vmem>>, vector<1x128xf32>
    %3 = arith.truncf %0 : vector<8x16xf32> to vector<8x16xbf16>
    %4 = arith.truncf %1 : vector<16x128xf32> to vector<16x128xbf16>
    %cst = arith.constant dense<0.000000e+00> : vector<8x128xf32>
    %5 = tpu.matmul %3, %4, %cst {dimension_numbers = #tpu.dot_dimension_numbers<[1], [0], [0], [1], [0, 0, 1, 1], [], []>} : vector<8x16xbf16>, vector<16x128xbf16>, vector<8x128xf32> -> vector<8x128xf32>
    %6 = vector.broadcast %2 : vector<1x128xf32> to vector<8x128xf32>
    %7 = arith.addf %5, %6 : vector<8x128xf32>
    %8 = math.tanh %7 : vector<8x128xf32>
    %c0_5 = arith.constant 0 : index
    %c0_6 = arith.constant 0 : index
    %9 = vector.load %arg5[%c0_5, %c0_6] : memref<128x128xf32, #tpu.memory_space<vmem>>, vector<128x128xf32>
    %c0_7 = arith.constant 0 : index
    %c0_8 = arith.constant 0 : index
    %10 = vector.load %arg6[%c0_7, %c0_8] : memref<1x128xf32, #tpu.memory_space<vmem>>, vector<1x128xf32>
    %11 = arith.truncf %8 : vector<8x128xf32> to vector<8x128xbf16>
    %12 = arith.truncf %9 : vector<128x128xf32> to vector<128x128xbf16>
    %cst_9 = arith.constant dense<0.000000e+00> : vector<8x128xf32>
    %13 = tpu.matmul %11, %12, %cst_9 {dimension_numbers = #tpu.dot_dimension_numbers<[1], [0], [0], [1], [0, 0, 1, 1], [], []>} : vector<8x128xbf16>, vector<128x128xbf16>, vector<8x128xf32> -> vector<8x128xf32>
    %14 = vector.broadcast %10 : vector<1x128xf32> to vector<8x128xf32>
    %15 = arith.addf %13, %14 : vector<8x128xf32>
    %16 = math.tanh %15 : vector<8x128xf32>
    %c0_10 = arith.constant 0 : index
    %c0_11 = arith.constant 0 : index
    %17 = vector.load %arg7[%c0_10, %c0_11] : memref<128x128xf32, #tpu.memory_space<vmem>>, vector<128x128xf32>
    %c0_12 = arith.constant 0 : index
    %c0_13 = arith.constant 0 : index
    %18 = vector.load %arg8[%c0_12, %c0_13] : memref<1x128xf32, #tpu.memory_space<vmem>>, vector<1x128xf32>
    %19 = arith.truncf %16 : vector<8x128xf32> to vector<8x128xbf16>
    %20 = arith.truncf %17 : vector<128x128xf32> to vector<128x128xbf16>
    %cst_14 = arith.constant dense<0.000000e+00> : vector<8x128xf32>
    %21 = tpu.matmul %19, %20, %cst_14 {dimension_numbers = #tpu.dot_dimension_numbers<[1], [0], [0], [1], [0, 0, 1, 1], [], []>} : vector<8x128xbf16>, vector<128x128xbf16>, vector<8x128xf32> -> vector<8x128xf32>
    %22 = vector.broadcast %18 : vector<1x128xf32> to vector<8x128xf32>
    %23 = arith.addf %21, %22 : vector<8x128xf32>
    %24 = tpu.iota {dimensions = array<i32: 1>} : vector<8x128xi32>
    %c4_i32 = arith.constant 4 : i32
    %25 = vector.broadcast %c4_i32 : i32 to vector<8x128xi32>
    %26 = arith.cmpi eq, %24, %25 : vector<8x128xi32>
    %cst_15 = arith.constant 0.000000e+00 : f32
    %27 = vector.broadcast %cst_15 : f32 to vector<8x128xf32>
    %28 = arith.select %26, %23, %27 : vector<8x128xi1>, vector<8x128xf32>
    %cst_16 = arith.constant dense<0.000000e+00> : vector<8xf32>
    %29 = vector.multi_reduction <add>, %28, %cst_16 [1] : vector<8x128xf32> to vector<8xf32>
    %30 = vector.shape_cast %29 : vector<8xf32> to vector<8x1xf32>
    %c4_i32_17 = arith.constant 4 : i32
    %31 = vector.broadcast %c4_i32_17 : i32 to vector<8x128xi32>
    %32 = arith.cmpi slt, %24, %31 : vector<8x128xi32>
    %cst_18 = arith.constant -1.000000e+30 : f32
    %33 = vector.broadcast %cst_18 : f32 to vector<8x128xf32>
    %34 = arith.select %32, %23, %33 : vector<8x128xi1>, vector<8x128xf32>
    %cst_19 = arith.constant dense<0xFF800000> : vector<8xf32>
    %35 = vector.multi_reduction <maximumf>, %34, %cst_19 [1] : vector<8x128xf32> to vector<8xf32>
    %36 = vector.shape_cast %35 : vector<8xf32> to vector<8x1xf32>
    %37 = vector.broadcast %36 : vector<8x1xf32> to vector<8x128xf32>
    %38 = arith.subf %34, %37 : vector<8x128xf32>
    %39 = math.exp %38 : vector<8x128xf32>
    %cst_20 = arith.constant dense<0.000000e+00> : vector<8xf32>
    %40 = vector.multi_reduction <add>, %39, %cst_20 [1] : vector<8x128xf32> to vector<8xf32>
    %41 = vector.shape_cast %40 : vector<8xf32> to vector<8x1xf32>
    %42 = math.log %41 : vector<8x1xf32>
    %43 = vector.broadcast %42 : vector<8x1xf32> to vector<8x128xf32>
    %44 = arith.subf %38, %43 : vector<8x128xf32>
    %45 = math.exp %44 : vector<8x128xf32>
    %c0_21 = arith.constant 0 : index
    %c0_22 = arith.constant 0 : index
    %46 = vector.load %arg2[%c0_21, %c0_22] : memref<8x1xi32, #tpu.memory_space<vmem>>, vector<8x1xi32>
    %47 = vector.broadcast %46 : vector<8x1xi32> to vector<8x128xi32>
    %48 = arith.cmpi eq, %24, %47 : vector<8x128xi32>
    %49 = arith.extui %48 : vector<8x128xi1> to vector<8x128xi32>
    %50 = arith.sitofp %49 : vector<8x128xi32> to vector<8x128xf32>
    %51 = arith.mulf %44, %50 : vector<8x128xf32>
    %cst_23 = arith.constant dense<0.000000e+00> : vector<8xf32>
    %52 = vector.multi_reduction <add>, %51, %cst_23 [1] : vector<8x128xf32> to vector<8xf32>
    %53 = vector.shape_cast %52 : vector<8xf32> to vector<8x1xf32>
    %54 = arith.mulf %45, %44 : vector<8x128xf32>
    %cst_24 = arith.constant dense<0.000000e+00> : vector<8xf32>
    %55 = vector.multi_reduction <add>, %54, %cst_24 [1] : vector<8x128xf32> to vector<8xf32>
    %56 = vector.shape_cast %55 : vector<8xf32> to vector<8x1xf32>
    %cst_25 = arith.constant 0.000000e+00 : f32
    %57 = vector.broadcast %cst_25 : f32 to vector<8x1xf32>
    %58 = arith.subf %57, %56 : vector<8x1xf32>
    %c0_i32 = arith.constant 0 : i32
    %59 = vector.broadcast %c0_i32 : i32 to vector<8x128xi32>
    %60 = arith.cmpi eq, %24, %59 : vector<8x128xi32>
    %c1_i32 = arith.constant 1 : i32
    %61 = vector.broadcast %c1_i32 : i32 to vector<8x128xi32>
    %62 = arith.cmpi eq, %24, %61 : vector<8x128xi32>
    %c2_i32 = arith.constant 2 : i32
    %63 = vector.broadcast %c2_i32 : i32 to vector<8x128xi32>
    %64 = arith.cmpi eq, %24, %63 : vector<8x128xi32>
    %cst_26 = arith.constant 0.000000e+00 : f32
    %65 = vector.shape_cast %58 : vector<8x1xf32> to vector<8x1xf32>
    %66 = vector.broadcast %65 : vector<8x1xf32> to vector<8x128xf32>
    %67 = vector.broadcast %cst_26 : f32 to vector<8x128xf32>
    %68 = arith.select %64, %66, %67 : vector<8x128xi1>, vector<8x128xf32>
    %69 = vector.shape_cast %30 : vector<8x1xf32> to vector<8x1xf32>
    %70 = vector.broadcast %69 : vector<8x1xf32> to vector<8x128xf32>
    %71 = arith.select %62, %70, %68 : vector<8x128xi1>, vector<8x128xf32>
    %72 = vector.shape_cast %53 : vector<8x1xf32> to vector<8x1xf32>
    %73 = vector.broadcast %72 : vector<8x1xf32> to vector<8x128xf32>
    %74 = arith.select %60, %73, %71 : vector<8x128xi1>, vector<8x128xf32>
    %c0_27 = arith.constant 0 : index
    %c0_28 = arith.constant 0 : index
    %75 = vector.load %arg9[%c0_27, %c0_28] : memref<8x128xf32, #tpu.memory_space<vmem>>, vector<8x128xf32>
    tpu.vector_store %arg9[%c0_27, %c0_28], %74 {strides = array<i32>} : memref<8x128xf32, #tpu.memory_space<vmem>>, vector<8x128xf32>,
    return
  }
  func.func @transform_0(%arg0: i32) -> (i32, i32) {
    %c0_i32 = arith.constant 0 : i32
    %c0_i32_0 = arith.constant 0 : i32
    return %arg0, %c0_i32 : i32, i32
  }
  func.func @transform_1(%arg0: i32) -> (i32, i32) {
    %c0_i32 = arith.constant 0 : i32
    %c0_i32_0 = arith.constant 0 : i32
    return %arg0, %c0_i32 : i32, i32
  }
  func.func @transform_2(%arg0: i32) -> (i32, i32) {
    %c0_i32 = arith.constant 0 : i32
    %c0_i32_0 = arith.constant 0 : i32
    %c0_i32_1 = arith.constant 0 : i32
    return %c0_i32, %c0_i32_0 : i32, i32
  }
  func.func @transform_3(%arg0: i32) -> (i32, i32) {
    %c0_i32 = arith.constant 0 : i32
    %c0_i32_0 = arith.constant 0 : i32
    %c0_i32_1 = arith.constant 0 : i32
    return %c0_i32, %c0_i32_0 : i32, i32
  }
  func.func @transform_4(%arg0: i32) -> (i32, i32) {
    %c0_i32 = arith.constant 0 : i32
    %c0_i32_0 = arith.constant 0 : i32
    %c0_i32_1 = arith.constant 0 : i32
    return %c0_i32, %c0_i32_0 : i32, i32
  }
  func.func @transform_5(%arg0: i32) -> (i32, i32) {
    %c0_i32 = arith.constant 0 : i32
    %c0_i32_0 = arith.constant 0 : i32
    %c0_i32_1 = arith.constant 0 : i32
    return %c0_i32, %c0_i32_0 : i32, i32
  }
  func.func @transform_6(%arg0: i32) -> (i32, i32) {
    %c0_i32 = arith.constant 0 : i32
    %c0_i32_0 = arith.constant 0 : i32
    %c0_i32_1 = arith.constant 0 : i32
    return %c0_i32, %c0_i32_0 : i32, i32
  }
  func.func @transform_7(%arg0: i32) -> (i32, i32) {
    %c0_i32 = arith.constant 0 : i32
    %c0_i32_0 = arith.constant 0 : i32
    %c0_i32_1 = arith.constant 0 : i32
    return %c0_i32, %c0_i32_0 : i32, i32
  }
  func.func @transform_8(%arg0: i32) -> (i32, i32) {
    %c0_i32 = arith.constant 0 : i32
    %c0_i32_0 = arith.constant 0 : i32
    return %arg0, %c0_i32 : i32, i32
  }
}

</mosaic_0001>

<llo_original>
// kernel: tpu_custom_call.1
$region0: #{tpu_custom_call.1}
  #allocation0 [shape = 'u32[]', space=smem, size = 0x4, offset = 0x4, fixed_abs, tag = 'smem constant byte address 0x4 - core index']
  #allocation1 [shape = 'u32[144,128]{1,0:T(1,128)}', space=vmem, size = 0x12000, scoped, tag = 'internal scratch']
  %s0 = inlined_call_operand.vmem [shape: f32[24,16], index: 0, kind: input, shape index: {}]
  %s1 = inlined_call_operand.vmem [shape: s32[24,1], index: 1, kind: input, shape index: {}]
  %s2 = inlined_call_operand.vmem [shape: f32[16,128], index: 2, kind: input, shape index: {}]
  %s3 = inlined_call_operand.vmem [shape: f32[1,128], index: 3, kind: input, shape index: {}]
  %s4 = inlined_call_operand.hbm [shape: f32[128,128], index: 4, kind: input, shape index: {}]
  %s5 = inlined_call_operand.vmem [shape: f32[1,128], index: 5, kind: input, shape index: {}]
  %s6 = inlined_call_operand.hbm [shape: f32[128,128], index: 6, kind: input, shape index: {}]
  %s7 = inlined_call_operand.vmem [shape: f32[1,128], index: 7, kind: input, shape index: {}]
  %s8 = inlined_call_operand.hbm [shape: f32[24,128], index: 8, kind: output, shape index: {}]
  %s9 = sld [smem:[#allocation0]]
  $region73: #{tpu_custom_call.1} parent=0
    _
  %s11 = ssub.s32 1, %s9
  %s12 = scalar_select 0, %s11, %s9
  $region1: #{tpu_custom_call.1} parent=0
    #allocation2 [shape = 'u8[65536]{0}', space=vmem, size = 0x10000, scoped, tag = 'input window, operand 4, single buffered']
    #allocation3 [shape = 's32[2]{0}', space=sflag, size = 0x8, scoped, tag = 'scoped memory for tpu_custom_call.1']
    #allocation4 [shape = 's32[2]{0}', space=sflag, size = 0x8, scoped, tag = 'scoped memory for tpu_custom_call.1']
    #allocation5 [shape = 'u8[65536]{0}', space=vmem, size = 0x10000, scoped, tag = 'input window, operand 6, single buffered']
    #allocation6 [shape = 's32[1]{0}', space=sflag, size = 0x4, scoped, tag = 'scoped memory for tpu_custom_call.1']
    #allocation7 [shape = 'u8[8192]{0}', space=vmem, size = 0x2000, scoped, tag = 'output window, operand 0']
    %13 = vsyncpa [#allocation3], 0
    %14 = vsyncpa [#allocation6], 0
    %15 = vsyncpa [#allocation4], 0
    %s16 = scalar_lea.sflag [#allocation4], 1
    %17 = vsyncpa %s16, 0
    loop: start=0, step=1, limit=5
    $region2: #{tpu_custom_call.1} parent=1 // loop_pre_header
      _
    $region3: #{tpu_custom_call.1} parent=1 // loop_header
      %s19 = sphi 0, %s23
      %p20 = scmp.ge.s32.totalorder %s19, 5
      %s29 = sphi 0, %s31
      %s32 = sphi 0, %s29
      %s33 = sphi 0, %s32
      %s49 = sphi 0, %s33
      %s55 = sphi 0, %s57
      %s58 = sphi 0, %s55
      %s59 = sphi 0, %s58
      %s75 = sphi 0, %s59
      %s79 = sphi 0, %s79
      %s81 = sphi 0, %s79
      %s82 = sphi 0, %s81
      %s96 = sphi 0, %s82
      %s100 = sphi 0, %s100
      %s102 = sphi 0, %s100
      %s103 = sphi 0, %s102
      %s117 = sphi 0, %s103
      %s121 = sphi 0, %s121
      %s123 = sphi 0, %s121
      %s124 = sphi 0, %s123
      %s138 = sphi 0, %s124
      %s142 = sphi 0, %s142
      %s144 = sphi 0, %s142
      %s145 = sphi 0, %s144
      %s159 = sphi 0, %s145
      %s163 = sphi 0, %s163
      %s165 = sphi 0, %s163
      %s166 = sphi 0, %s165
      %s180 = sphi 0, %s166
      %s184 = sphi 0, %s184
      %s186 = sphi 0, %s184
      %s187 = sphi 0, %s186
      %s201 = sphi 0, %s187
      %s207 = sphi 0, %s209
      %s210 = sphi 0, %s207
      %s211 = sphi 0, %s210
      %s227 = sphi 0, %s211
    $region4: #{tpu_custom_call.1} parent=1 // loop_header_branch
      %22 = sbr.rel (%p20) target = $region8
    $region5: #{tpu_custom_call.1} parent=1 // loop_body
      %s24 = ssub.s32 %s19, 1
      %s25 = ssub.s32 %s19, 2
      %s26 = sadd.s32 %s19, 1
      %s27 = ssub.s32 %s19, %s26
      %p28 = scmp.eq.s32.totalorder %s27, 0
      %s30 = sadd.s32 %s29, 1
      %s31 = scalar_select %p28, %s29, %s30
      %p34 = pneg %p28
      %p35 = scmp.eq.s32.totalorder %s19, 2
      %p36 = por %p34, %p35
      %p37 = scmp.ne.s32.totalorder %s29, %s32
      %p38 = scmp.eq.s32.totalorder %s19, 0
      %p39 = por %p37, %p38
      %p40 = scmp.ne.s32.totalorder %s29, %s32
      %p41 = scmp.eq.s32.totalorder %s24, 2
      %p42 = por %p40, %p41
      %p43 = scmp.ne.s32.totalorder %s32, %s33
      %p44 = scmp.eq.s32.totalorder %s24, 0
      %p45 = por %p43, %p44
      %p46 = scmp.ne.s32.totalorder %s32, %s33
      %p47 = scmp.eq.s32.totalorder %s25, 2
      %p48 = por %p46, %p47
      %p50 = scmp.ne.s32.totalorder %s33, %s49
      %p51 = scmp.eq.s32.totalorder %s25, 0
      %p52 = por %p50, %p51
      %s53 = ssub.s32 %s19, %s26
      %p54 = scmp.eq.s32.totalorder %s53, 0
      %s56 = sadd.s32 %s55, 1
      %s57 = scalar_select %p54, %s55, %s56
      %p60 = pneg %p54
      %p61 = scmp.eq.s32.totalorder %s19, 2
      %p62 = por %p60, %p61
      %p63 = scmp.ne.s32.totalorder %s55, %s58
      %p64 = scmp.eq.s32.totalorder %s19, 0
      %p65 = por %p63, %p64
      %p66 = scmp.ne.s32.totalorder %s55, %s58
      %p67 = scmp.eq.s32.totalorder %s24, 2
      %p68 = por %p66, %p67
      %p69 = scmp.ne.s32.totalorder %s58, %s59
      %p70 = scmp.eq.s32.totalorder %s24, 0
      %p71 = por %p69, %p70
      %p72 = scmp.ne.s32.totalorder %s58, %s59
      %p73 = scmp.eq.s32.totalorder %s25, 2
      %p74 = por %p72, %p73
      %p76 = scmp.ne.s32.totalorder %s59, %s75
      %p77 = scmp.eq.s32.totalorder %s25, 0
      %p78 = por %p76, %p77
      %s80 = sadd.s32 %s79, 1
      %p83 = scmp.eq.s32.totalorder %s19, 2
      %p84 = scmp.ne.s32.totalorder %s79, %s81
      %p85 = scmp.eq.s32.totalorder %s19, 0
      %p86 = por %p84, %p85
      %p87 = scmp.ne.s32.totalorder %s79, %s81
      %p88 = scmp.eq.s32.totalorder %s24, 2
      %p89 = por %p87, %p88
      %p90 = scmp.ne.s32.totalorder %s81, %s82
      %p91 = scmp.eq.s32.totalorder %s24, 0
      %p92 = por %p90, %p91
      %p93 = scmp.ne.s32.totalorder %s81, %s82
      %p94 = scmp.eq.s32.totalorder %s25, 2
      %p95 = por %p93, %p94
      %p97 = scmp.ne.s32.totalorder %s82, %s96
      %p98 = scmp.eq.s32.totalorder %s25, 0
      %p99 = por %p97, %p98
      %s101 = sadd.s32 %s100, 1
      %p104 = scmp.eq.s32.totalorder %s19, 2
      %p105 = scmp.ne.s32.totalorder %s100, %s102
      %p106 = scmp.eq.s32.totalorder %s19, 0
      %p107 = por %p105, %p106
      %p108 = scmp.ne.s32.totalorder %s100, %s102
      %p109 = scmp.eq.s32.totalorder %s24, 2
      %p110 = por %p108, %p109
      %p111 = scmp.ne.s32.totalorder %s102, %s103
      %p112 = scmp.eq.s32.totalorder %s24, 0
      %p113 = por %p111, %p112
      %p114 = scmp.ne.s32.totalorder %s102, %s103
      %p115 = scmp.eq.s32.totalorder %s25, 2
      %p116 = por %p114, %p115
      %p118 = scmp.ne.s32.totalorder %s103, %s117
      %p119 = scmp.eq.s32.totalorder %s25, 0
      %p120 = por %p118, %p119
      %s122 = sadd.s32 %s121, 1
      %p125 = scmp.eq.s32.totalorder %s19, 2
      %p126 = scmp.ne.s32.totalorder %s121, %s123
      %p127 = scmp.eq.s32.totalorder %s19, 0
      %p128 = por %p126, %p127
      %p129 = scmp.ne.s32.totalorder %s121, %s123
      %p130 = scmp.eq.s32.totalorder %s24, 2
      %p131 = por %p129, %p130
      %p132 = scmp.ne.s32.totalorder %s123, %s124
      %p133 = scmp.eq.s32.totalorder %s24, 0
      %p134 = por %p132, %p133
      %p135 = scmp.ne.s32.totalorder %s123, %s124
      %p136 = scmp.eq.s32.totalorder %s25, 2
      %p137 = por %p135, %p136
      %p139 = scmp.ne.s32.totalorder %s124, %s138
      %p140 = scmp.eq.s32.totalorder %s25, 0
      %p141 = por %p139, %p140
      %s143 = sadd.s32 %s142, 1
      %p146 = scmp.eq.s32.totalorder %s19, 2
      %p147 = scmp.ne.s32.totalorder %s142, %s144
      %p148 = scmp.eq.s32.totalorder %s19, 0
      %p149 = por %p147, %p148
      %p150 = scmp.ne.s32.totalorder %s142, %s144
      %p151 = scmp.eq.s32.totalorder %s24, 2
      %p152 = por %p150, %p151
      %p153 = scmp.ne.s32.totalorder %s144, %s145
      %p154 = scmp.eq.s32.totalorder %s24, 0
      %p155 = por %p153, %p154
      %p156 = scmp.ne.s32.totalorder %s144, %s145
      %p157 = scmp.eq.s32.totalorder %s25, 2
      %p158 = por %p156, %p157
      %p160 = scmp.ne.s32.totalorder %s145, %s159
      %p161 = scmp.eq.s32.totalorder %s25, 0
      %p162 = por %p160, %p161
      %s164 = sadd.s32 %s163, 1
      %p167 = scmp.eq.s32.totalorder %s19, 2
      %p168 = scmp.ne.s32.totalorder %s163, %s165
      %p169 = scmp.eq.s32.totalorder %s19, 0
      %p170 = por %p168, %p169
      %p171 = scmp.ne.s32.totalorder %s163, %s165
      %p172 = scmp.eq.s32.totalorder %s24, 2
      %p173 = por %p171, %p172
      %p174 = scmp.ne.s32.totalorder %s165, %s166
      %p175 = scmp.eq.s32.totalorder %s24, 0
      %p176 = por %p174, %p175
      %p177 = scmp.ne.s32.totalorder %s165, %s166
      %p178 = scmp.eq.s32.totalorder %s25, 2
      %p179 = por %p177, %p178
      %p181 = scmp.ne.s32.totalorder %s166, %s180
      %p182 = scmp.eq.s32.totalorder %s25, 0
      %p183 = por %p181, %p182
      %s185 = sadd.s32 %s184, 1
      %p188 = scmp.eq.s32.totalorder %s19, 2
      %p189 = scmp.ne.s32.totalorder %s184, %s186
      %p190 = scmp.eq.s32.totalorder %s19, 0
      %p191 = por %p189, %p190
      %p192 = scmp.ne.s32.totalorder %s184, %s186
      %p193 = scmp.eq.s32.totalorder %s24, 2
      %p194 = por %p192, %p193
      %p195 = scmp.ne.s32.totalorder %s186, %s187
      %p196 = scmp.eq.s32.totalorder %s24, 0
      %p197 = por %p195, %p196
      %p198 = scmp.ne.s32.totalorder %s186, %s187
      %p199 = scmp.eq.s32.totalorder %s25, 2
      %p200 = por %p198, %p199
      %p202 = scmp.ne.s32.totalorder %s187, %s201
      %p203 = scmp.eq.s32.totalorder %s25, 0
      %p204 = por %p202, %p203
      %s205 = ssub.s32 %s19, %s26
      %p206 = scmp.eq.s32.totalorder %s205, 0
      %s208 = sadd.s32 %s207, 1
      %s209 = scalar_select %p206, %s207, %s208
      %p212 = pneg %p206
      %p213 = scmp.eq.s32.totalorder %s19, 2
      %p214 = por %p212, %p213
      %p215 = scmp.ne.s32.totalorder %s207, %s210
      %p216 = scmp.eq.s32.totalorder %s19, 0
      %p217 = por %p215, %p216
      %p218 = scmp.ne.s32.totalorder %s207, %s210
      %p219 = scmp.eq.s32.totalorder %s24, 2
      %p220 = por %p218, %p219
      %p221 = scmp.ne.s32.totalorder %s210, %s211
      %p222 = scmp.eq.s32.totalorder %s24, 0
      %p223 = por %p221, %p222
      %p224 = scmp.ne.s32.totalorder %s210, %s211
      %p225 = scmp.eq.s32.totalorder %s25, 2
      %p226 = por %p224, %p225
      %p228 = scmp.ne.s32.totalorder %s211, %s227
      %p229 = scmp.eq.s32.totalorder %s25, 0
      %p230 = por %p228, %p229
      %p231 = scmp.le.s32.totalorder 1, %s19
      %p232 = scmp.lt.s32.totalorder %s19, 4
      %p233 = pnand %p231, %p232
      %p234 = pneg %p233
      // Predicated region
      $region9: #{tpu_custom_call.1} parent=5 // pred_check
        _
      $region10: #{tpu_custom_call.1} parent=5 // pred_check_branch
        %236 = sbr.rel (%p233) target = $region12
      $region11: #{tpu_custom_call.1} parent=5 // pred_region
        %s237 = ssub.s32 %s19, 1
        // Predicated region
        $region13: #{tpu_custom_call.1} parent=11 // pred_check
          %p238 = pneg %p92
        $region14: #{tpu_custom_call.1} parent=11 // pred_check_branch
          %240 = sbr.rel (%p238) target = $region16
        $region15: #{tpu_custom_call.1} parent=11 // pred_region
          _
        $region16: #{tpu_custom_call.1} parent=11 // pred_fallthru
          _
        // Predicated region
        $region17: #{tpu_custom_call.1} parent=11 // pred_check
          %p241 = pneg %p113
        $region18: #{tpu_custom_call.1} parent=11 // pred_check_branch
          %243 = sbr.rel (%p241) target = $region20
        $region19: #{tpu_custom_call.1} parent=11 // pred_region
          _
        $region20: #{tpu_custom_call.1} parent=11 // pred_fallthru
          _
        // Predicated region
        $region21: #{tpu_custom_call.1} parent=11 // pred_check
          %p244 = pneg %p134
        $region22: #{tpu_custom_call.1} parent=11 // pred_check_branch
          %246 = sbr.rel (%p244) target = $region24
        $region23: #{tpu_custom_call.1} parent=11 // pred_region
          %s248 = ssub.s32 2048, 2048
          %249 = vsyncadd [#allocation3], %s248
          %s250 = sshll.u32 [#allocation2], 4
          %s251 = int_to_ptr.vmem [resolvable:$true] %s250
          %256 = dma.hbm_to_vmem [thread:$0]  %s4, 2048, %s251, [#allocation3], 128, 128, 8
        $region24: #{tpu_custom_call.1} parent=11 // pred_fallthru
          _
        // Predicated region
        $region25: #{tpu_custom_call.1} parent=11 // pred_check
          %p257 = pneg %p155
        $region26: #{tpu_custom_call.1} parent=11 // pred_check_branch
          %259 = sbr.rel (%p257) target = $region28
        $region27: #{tpu_custom_call.1} parent=11 // pred_region
          _
        $region28: #{tpu_custom_call.1} parent=11 // pred_fallthru
          _
        // Predicated region
        $region29: #{tpu_custom_call.1} parent=11 // pred_check
          %p260 = pneg %p176
        $region30: #{tpu_custom_call.1} parent=11 // pred_check_branch
          %262 = sbr.rel (%p260) target = $region32
        $region31: #{tpu_custom_call.1} parent=11 // pred_region
          %s264 = ssub.s32 2048, 2048
          %265 = vsyncadd [#allocation6], %s264
          %s266 = sshll.u32 [#allocation5], 4
          %s267 = int_to_ptr.vmem [resolvable:$true] %s266
          %272 = dma.hbm_to_vmem [thread:$0]  %s6, 2048, %s267, [#allocation6], 128, 128, 8
        $region32: #{tpu_custom_call.1} parent=11 // pred_fallthru
          _
        // Predicated region
        $region33: #{tpu_custom_call.1} parent=11 // pred_check
          %p273 = pneg %p197
        $region34: #{tpu_custom_call.1} parent=11 // pred_check_branch
          %275 = sbr.rel (%p273) target = $region36
        $region35: #{tpu_custom_call.1} parent=11 // pred_region
          _
        $region36: #{tpu_custom_call.1} parent=11 // pred_fallthru
          _
      $region12: #{tpu_custom_call.1} parent=5 // pred_fallthru
        _
      %p276 = scmp.lt.s32.totalorder %s19, 3
      // Predicated region
      $region37: #{tpu_custom_call.1} parent=5 // pred_check
        %p277 = pneg %p276
      $region38: #{tpu_custom_call.1} parent=5 // pred_check_branch
        %279 = sbr.rel (%p277) target = $region40
      $region39: #{tpu_custom_call.1} parent=5 // pred_region
        // Predicated region
        $region41: #{tpu_custom_call.1} parent=39 // pred_check
          %p280 = pneg %p39
        $region42: #{tpu_custom_call.1} parent=39 // pred_check_branch
          %282 = sbr.rel (%p280) target = $region44
        $region43: #{tpu_custom_call.1} parent=39 // pred_region
          %p283 = scmp.lt.s32.totalorder %s19, 2
          %s284 = scalar_select %p283, %s19, 2
          %s285 = smul.addr %s284, 8
          %s286 = scalar_lea.vmem %s0, %s285
        $region44: #{tpu_custom_call.1} parent=39 // pred_fallthru
          _
        // Predicated region
        $region45: #{tpu_custom_call.1} parent=39 // pred_check
          %p287 = pneg %p65
        $region46: #{tpu_custom_call.1} parent=39 // pred_check_branch
          %289 = sbr.rel (%p287) target = $region48
        $region47: #{tpu_custom_call.1} parent=39 // pred_region
          %p290 = scmp.lt.s32.totalorder %s19, 2
          %s291 = scalar_select %p290, %s19, 2
          %s292 = smul.addr %s291, 8
          %s293 = scalar_lea.vmem %s1, %s292
        $region48: #{tpu_custom_call.1} parent=39 // pred_fallthru
          _
      $region40: #{tpu_custom_call.1} parent=5 // pred_fallthru
        _
      %p294 = scmp.le.s32.totalorder 1, %s19
      %p295 = scmp.lt.s32.totalorder %s19, 4
      %p296 = pnand %p294, %p295
      %p297 = pneg %p296
      // Predicated region
      $region49: #{tpu_custom_call.1} parent=5 // pred_check
        _
      $region50: #{tpu_custom_call.1} parent=5 // pred_check_branch
        %299 = sbr.rel (%p296) target = $region52
      $region51: #{tpu_custom_call.1} parent=5 // pred_region
        %s300 = ssub.s32 %s19, 1
        // Predicated region
        $region53: #{tpu_custom_call.1} parent=51 // pred_check
          %p301 = pneg %p134
        $region54: #{tpu_custom_call.1} parent=51 // pred_check_branch
          %303 = sbr.rel (%p301) target = $region56
        $region55: #{tpu_custom_call.1} parent=51 // pred_region
          %304 = dma.done [#allocation3], 2048
        $region56: #{tpu_custom_call.1} parent=51 // pred_fallthru
          _
        // Predicated region
        $region57: #{tpu_custom_call.1} parent=51 // pred_check
          %p305 = pneg %p176
        $region58: #{tpu_custom_call.1} parent=51 // pred_check_branch
          %307 = sbr.rel (%p305) target = $region60
        $region59: #{tpu_custom_call.1} parent=51 // pred_region
          %308 = dma.done [#allocation6], 2048
        $region60: #{tpu_custom_call.1} parent=51 // pred_fallthru
          _
        %p309 = scmp.lt.s32.totalorder %s24, 2
        %s310 = scalar_select %p309, %s24, 2
        %s311 = smul.addr %s310, 8
        %s312 = scalar_lea.vmem %s0, %s311
        %p313 = pneg %p45
        %p314 = pneg %p42
        %p315 = scmp.lt.s32.totalorder %s24, 2
        %s316 = scalar_select %p315, %s24, 2
        %s317 = smul.addr %s316, 8
        %s318 = scalar_lea.vmem %s1, %s317
        %p319 = pneg %p71
        %p320 = pneg %p68
        %p321 = pneg %p92
        %p322 = pneg %p89
        %p323 = pneg %p113
        %p324 = pneg %p110
        %p325 = pneg %p134
        %p326 = pneg %p131
        %p327 = pneg %p155
        %p328 = pneg %p152
        %p329 = pneg %p176
        %p330 = pneg %p173
        %p331 = pneg %p197
        %p332 = pneg %p194
        %p333 = pneg %p223
        %p334 = pneg %p220
        %s335 = sand.u32 %s210, 1
        %s336 = scalar_lea.sflag [#allocation4], %s335
        %s337 = sand.u32 %s210, 1
        %s338 = smul.addr %s337, 8
        %s339 = scalar_lea.vmem [#allocation7], %s338
        %p340 = scmp.lt.s32.totalorder %s24, 2
        %s341 = scalar_select %p340, %s24, 2
        %s342 = smul.addr %s341, 8
        %s343 = scalar_lea.vmem %s0, %s342
        %p344 = scmp.lt.s32.totalorder %s24, 2
        %s345 = scalar_select %p344, %s24, 2
        %s346 = smul.addr %s345, 8
        %s347 = scalar_lea.vmem %s1, %s346
        %v349 = vld [vmem:[%s343] sm:$0xff]
        %v350 = vld [vmem:[%s2] sm:$0xff]
        %v351 = vld [vmem:[%s2 + $0x8] sm:$0xff]
        %v352 = vld [vmem:[%s3] sm:$0x1]
        %v353 = vpack.c.bf16 %v349, %v349
        %v354 = vpack.c.bf16 %v351, %v350
        %v356 = vlaneseq
        %v357 = vshrl.u32 %v356, 7
        %v358 = vsub.s32 0, %v357
        %v359 = vrot.slane %v352, %v358
        %vm361 = vcmask 130048
        %v363 = vsel %vm361, %v353, 0
        %365 = vmatprep.subr.bf16.mxu0 0
        %366 = vmatpush1.bf16.msra.mxu0 %v354
        %367 = vmatprep.subr.bf16.mxu0 0
        %368 = vmatpush1.bf16.msra.mxu0 0
        %369 = vmatprep.subr.bf16.mxu0 0
        %370 = vmatpush1.bf16.msra.mxu0 0
        %371 = vmatprep.subr.bf16.mxu0 0
        %372 = vmatpush1.bf16.msra.mxu0 0
        %373 = vmatprep.subr.bf16.mxu0 0
        %374 = vmatpush1.bf16.msra.mxu0 0
        %375 = vmatprep.subr.bf16.mxu0 0
        %376 = vmatpush1.bf16.msra.mxu0 0
        %377 = vmatprep.subr.bf16.mxu0 0
        %378 = vmatpush1.bf16.msra.mxu0 0
        %379 = vmatprep.subr.bf16.mxu0 0
        %380 = vmatpush1.bf16.msra.mxu0 0
        %381 = vmatprep.subr.bf16.mxu0 0
        %382 = vmatpush1.bf16.msra.mxu0 0
        %383 = vmatprep.subr.bf16.mxu0 0
        %384 = vmatpush1.bf16.msra.mxu0 0
        %385 = vmatprep.subr.bf16.mxu0 0
        %386 = vmatpush1.bf16.msra.mxu0 0
        %387 = vmatprep.subr.bf16.mxu0 0
        %388 = vmatpush1.bf16.msra.mxu0 0
        %389 = vmatprep.subr.bf16.mxu0 0
        %390 = vmatpush1.bf16.msra.mxu0 0
        %391 = vmatprep.subr.bf16.mxu0 0
        %392 = vmatpush1.bf16.msra.mxu0 0
        %393 = vmatprep.subr.bf16.mxu0 0
        %394 = vmatpush1.bf16.msra.mxu0 0
        %395 = vmatprep.subr.bf16.mxu0 0
        %396 = vmatpush1.bf16.msra.mxu0 0
        %397 = vmatprep.mubr.bf16.mxu0 0
        %398 = vmatmul.mubr.bf16.gmra.mrb[0].mxu0 %v363
        %v399 = vpop.f32.mrb[0].mxu0
        %v400 = vadd.f32 %v359, %v399
        %v401 = vpop.f32.mrb[0].mxu0
        %v402 = vpop.f32.mrb[0].mxu0
        %v403 = vpop.f32.mrb[0].mxu0
        %404 = vdwg.mxu0
        %v405 = vtanh.pop %v400
        %v406 = vld [vmem:[#allocation2] sm:$0xff]
        %v407 = vld [vmem:[#allocation2 + $0x8] sm:$0xff]
        %v408 = vld [vmem:[#allocation2 + $0x10] sm:$0xff]
        %v409 = vld [vmem:[#allocation2 + $0x18] sm:$0xff]
        %v410 = vld [vmem:[#allocation2 + $0x20] sm:$0xff]
        %v411 = vld [vmem:[#allocation2 + $0x28] sm:$0xff]
        %v412 = vld [vmem:[#allocation2 + $0x30] sm:$0xff]
        %v413 = vld [vmem:[#allocation2 + $0x38] sm:$0xff]
        %v414 = vld [vmem:[#allocation2 + $0x40] sm:$0xff]
        %v415 = vld [vmem:[#allocation2 + $0x48] sm:$0xff]
        %v416 = vld [vmem:[#allocation2 + $0x50] sm:$0xff]
        %v417 = vld [vmem:[#allocation2 + $0x58] sm:$0xff]
        %v418 = vld [vmem:[#allocation2 + $0x60] sm:$0xff]
        %v419 = vld [vmem:[#allocation2 + $0x68] sm:$0xff]
        %v420 = vld [vmem:[#allocation2 + $0x70] sm:$0xff]
        %v421 = vld [vmem:[#allocation2 + $0x78] sm:$0xff]
        %v422 = vld [vmem:[%s5] sm:$0x1]
        %v423 = vpack.c.bf16 %v405, %v405
        %v424 = vpack.c.bf16 %v407, %v406
        %v425 = vpack.c.bf16 %v409, %v408
        %v426 = vpack.c.bf16 %v411, %v410
        %v427 = vpack.c.bf16 %v413, %v412
        %v428 = vpack.c.bf16 %v415, %v414
        %v429 = vpack.c.bf16 %v417, %v416
        %v430 = vpack.c.bf16 %v419, %v418
        %v431 = vpack.c.bf16 %v421, %v420
        %v433 = vlaneseq
        %v434 = vshrl.u32 %v433, 7
        %v435 = vsub.s32 0, %v434
        %v436 = vrot.slane %v422, %v435
        %438 = vmatprep.subr.bf16.mxu0 0
        %439 = vmatpush1.bf16.msra.mxu0 %v424
        %440 = vmatprep.subr.bf16.mxu0 0
        %441 = vmatpush1.bf16.msra.mxu0 %v425
        %442 = vmatprep.subr.bf16.mxu0 0
        %443 = vmatpush1.bf16.msra.mxu0 %v426
        %444 = vmatprep.subr.bf16.mxu0 0
        %445 = vmatpush1.bf16.msra.mxu0 %v427
        %446 = vmatprep.subr.bf16.mxu0 0
        %447 = vmatpush1.bf16.msra.mxu0 %v428
        %448 = vmatprep.subr.bf16.mxu0 0
        %449 = vmatpush1.bf16.msra.mxu0 %v429
        %450 = vmatprep.subr.bf16.mxu0 0
        %451 = vmatpush1.bf16.msra.mxu0 %v430
        %452 = vmatprep.subr.bf16.mxu0 0
        %453 = vmatpush1.bf16.msra.mxu0 %v431
        %454 = vmatprep.subr.bf16.mxu0 0
        %455 = vmatpush1.bf16.msra.mxu0 0
        %456 = vmatprep.subr.bf16.mxu0 0
        %457 = vmatpush1.bf16.msra.mxu0 0
        %458 = vmatprep.subr.bf16.mxu0 0
        %459 = vmatpush1.bf16.msra.mxu0 0
        %460 = vmatprep.subr.bf16.mxu0 0
        %461 = vmatpush1.bf16.msra.mxu0 0
        %462 = vmatprep.subr.bf16.mxu0 0
        %463 = vmatpush1.bf16.msra.mxu0 0
        %464 = vmatprep.subr.bf16.mxu0 0
        %465 = vmatpush1.bf16.msra.mxu0 0
        %466 = vmatprep.subr.bf16.mxu0 0
        %467 = vmatpush1.bf16.msra.mxu0 0
        %468 = vmatprep.subr.bf16.mxu0 0
        %469 = vmatpush1.bf16.msra.mxu0 0
        %470 = vmatprep.mubr.bf16.mxu0 0
        %471 = vmatmul.mubr.bf16.gmra.mrb[0].mxu0 %v423
        %v472 = vpop.f32.mrb[0].mxu0
        %v473 = vadd.f32 %v436, %v472
        %v474 = vpop.f32.mrb[0].mxu0
        %v475 = vpop.f32.mrb[0].mxu0
        %v476 = vpop.f32.mrb[0].mxu0
        %477 = vdwg.mxu0
        %v478 = vtanh.pop %v473
        %v479 = vld [vmem:[#allocation5] sm:$0xff]
        %v480 = vld [vmem:[#allocation5 + $0x8] sm:$0xff]
        %v481 = vld [vmem:[#allocation5 + $0x10] sm:$0xff]
        %v482 = vld [vmem:[#allocation5 + $0x18] sm:$0xff]
        %v483 = vld [vmem:[#allocation5 + $0x20] sm:$0xff]
        %v484 = vld [vmem:[#allocation5 + $0x28] sm:$0xff]
        %v485 = vld [vmem:[#allocation5 + $0x30] sm:$0xff]
        %v486 = vld [vmem:[#allocation5 + $0x38] sm:$0xff]
        %v487 = vld [vmem:[#allocation5 + $0x40] sm:$0xff]
        %v488 = vld [vmem:[#allocation5 + $0x48] sm:$0xff]
        %v489 = vld [vmem:[#allocation5 + $0x50] sm:$0xff]
        %v490 = vld [vmem:[#allocation5 + $0x58] sm:$0xff]
        %v491 = vld [vmem:[#allocation5 + $0x60] sm:$0xff]
        %v492 = vld [vmem:[#allocation5 + $0x68] sm:$0xff]
        %v493 = vld [vmem:[#allocation5 + $0x70] sm:$0xff]
        %v494 = vld [vmem:[#allocation5 + $0x78] sm:$0xff]
        %v495 = vld [vmem:[%s7] sm:$0x1]
        %v496 = vpack.c.bf16 %v478, %v478
        %v497 = vpack.c.bf16 %v480, %v479
        %v498 = vpack.c.bf16 %v482, %v481
        %v499 = vpack.c.bf16 %v484, %v483
        %v500 = vpack.c.bf16 %v486, %v485
        %v501 = vpack.c.bf16 %v488, %v487
        %v502 = vpack.c.bf16 %v490, %v489
        %v503 = vpack.c.bf16 %v492, %v491
        %v504 = vpack.c.bf16 %v494, %v493
        %v506 = vlaneseq
        %v507 = vshrl.u32 %v506, 7
        %v508 = vsub.s32 0, %v507
        %v509 = vrot.slane %v495, %v508
        %511 = vmatprep.subr.bf16.mxu0 0
        %512 = vmatpush1.bf16.msra.mxu0 %v497
        %513 = vmatprep.subr.bf16.mxu0 0
        %514 = vmatpush1.bf16.msra.mxu0 %v498
        %515 = vmatprep.subr.bf16.mxu0 0
        %516 = vmatpush1.bf16.msra.mxu0 %v499
        %517 = vmatprep.subr.bf16.mxu0 0
        %518 = vmatpush1.bf16.msra.mxu0 %v500
        %519 = vmatprep.subr.bf16.mxu0 0
        %520 = vmatpush1.bf16.msra.mxu0 %v501
        %521 = vmatprep.subr.bf16.mxu0 0
        %522 = vmatpush1.bf16.msra.mxu0 %v502
        %523 = vmatprep.subr.bf16.mxu0 0
        %524 = vmatpush1.bf16.msra.mxu0 %v503
        %525 = vmatprep.subr.bf16.mxu0 0
        %526 = vmatpush1.bf16.msra.mxu0 %v504
        %527 = vmatprep.subr.bf16.mxu0 0
        %528 = vmatpush1.bf16.msra.mxu0 0
        %529 = vmatprep.subr.bf16.mxu0 0
        %530 = vmatpush1.bf16.msra.mxu0 0
        %531 = vmatprep.subr.bf16.mxu0 0
        %532 = vmatpush1.bf16.msra.mxu0 0
        %533 = vmatprep.subr.bf16.mxu0 0
        %534 = vmatpush1.bf16.msra.mxu0 0
        %535 = vmatprep.subr.bf16.mxu0 0
        %536 = vmatpush1.bf16.msra.mxu0 0
        %537 = vmatprep.subr.bf16.mxu0 0
        %538 = vmatpush1.bf16.msra.mxu0 0
        %539 = vmatprep.subr.bf16.mxu0 0
        %540 = vmatpush1.bf16.msra.mxu0 0
        %541 = vmatprep.subr.bf16.mxu0 0
        %542 = vmatpush1.bf16.msra.mxu0 0
        %543 = vmatprep.mubr.bf16.mxu0 0
        %544 = vmatmul.mubr.bf16.gmra.mrb[0].mxu0 %v496
        %v545 = vpop.f32.mrb[0].mxu0
        %v546 = vadd.f32 %v509, %v545
        %v547 = vpop.f32.mrb[0].mxu0
        %v548 = vpop.f32.mrb[0].mxu0
        %v549 = vpop.f32.mrb[0].mxu0
        %550 = vdwg.mxu0
        %v551 = vlaneseq
        %v552 = vand.u32 %v551, 127
        %vm553 = vcmp.eq.s32.totalorder %v552, 4
        %v554 = vsel %vm553, %v546, 0.0
        %555 = vadd.xlane.f32.xlu0 %v554
        %v556 = vpop.xlane.xlu0 %555
        %vm557 = vcmp.lt.s32.totalorder %v552, 4
        %v558 = vsel %vm557, %v546, -1e+30
        %559 = vmax.xlane.f32.xlu0 %v558
        %v560 = vpop.xlane.xlu0 %559
        %v561 = vsub.f32 %v558, %v560
        %v562 = vmul.f32 %v561, 1.442695
        %v563 = vpow.pop %v562
        %564 = vadd.xlane.f32.xlu0 %v563
        %v565 = vpop.xlane.xlu0 %564
        %v566 = vlog2.pop %v565
        %v567 = vmul.f32 %v566, 0.6931472
        %v568 = vsub.f32 %v561, %v567
        %v569 = vmul.f32 %v568, 1.442695
        %v570 = vpow.pop %v569
        %v571 = vld [vmem:[%s347] sm:$0xff]
        %572 = vset.pattern.permute.xlu0 0
        %573 = vperm.xlu0 %572, %v571
        %v574 = vpop.permute.xlu0 %573
        %vm575 = vcmp.eq.s32.totalorder %v552, %v574
        %v576 = vsel %vm575, 1, 0
        %v577 = vcvt.s32.f32 %v576
        %v578 = vmul.f32 %v568, %v577
        %579 = vadd.xlane.f32.xlu0 %v578
        %v580 = vpop.xlane.xlu0 %579
        %v581 = vmul.f32 %v570, %v568
        %582 = vadd.xlane.f32.xlu0 %v581
        %v583 = vpop.xlane.xlu0 %582
        %v584 = vsub.f32 0.0, %v583
        %vm585 = vcmp.eq.s32.totalorder %v552, 0
        %vm586 = vcmp.eq.s32.totalorder %v552, 1
        %vm587 = vcmp.eq.s32.totalorder %v552, 2
        %v588 = vsel %vm587, %v584, 0.0
        %v589 = vsel %vm586, %v556, %v588
        %v590 = vsel %vm585, %v580, %v589
        %591 = vst [vmem:[%s339] sm:$0xff] %v590
        %s592 = sand.u32 %s210, 1
        %s593 = scalar_lea.sflag [#allocation4], %s592
        %s594 = sand.u32 %s210, 1
        %s595 = smul.addr %s594, 8
        %s596 = scalar_lea.vmem [#allocation7], %s595
        // Predicated region
        $region61: #{tpu_custom_call.1} parent=51 // pred_check
          %p597 = pneg %p220
        $region62: #{tpu_custom_call.1} parent=51 // pred_check_branch
          %599 = sbr.rel (%p597) target = $region64
        $region63: #{tpu_custom_call.1} parent=51 // pred_region
          %s601 = ssub.s32 128, 128
          %602 = vsyncadd %s593, %s601
          %s603 = smul.addr %s24, 128
          %s604 = scalar_lea.hbm %s8, %s603
          %s606 = sshll.u32 %s596, 4
          %s607 = int_to_ptr.vmem [resolvable:$true] %s606
          %609 = dma.vmem_to_hbm [thread:$0]  %s607, 128, %s604, %s593
        $region64: #{tpu_custom_call.1} parent=51 // pred_fallthru
          _
      $region52: #{tpu_custom_call.1} parent=5 // pred_fallthru
        _
      %p610 = scmp.le.s32.totalorder 2, %s19
      // Predicated region
      $region65: #{tpu_custom_call.1} parent=5 // pred_check
        %p611 = pneg %p610
      $region66: #{tpu_custom_call.1} parent=5 // pred_check_branch
        %613 = sbr.rel (%p611) target = $region68
      $region67: #{tpu_custom_call.1} parent=5 // pred_region
        %s614 = ssub.s32 %s19, 2
        // Predicated region
        $region69: #{tpu_custom_call.1} parent=67 // pred_check
          %p615 = pneg %p226
        $region70: #{tpu_custom_call.1} parent=67 // pred_check_branch
          %617 = sbr.rel (%p615) target = $region72
        $region71: #{tpu_custom_call.1} parent=67 // pred_region
          %s618 = sand.u32 %s211, 1
          %s619 = scalar_lea.sflag [#allocation4], %s618
          %s620 = sand.u32 %s211, 1
          %s621 = smul.addr %s620, 8
          %s622 = scalar_lea.vmem [#allocation7], %s621
          %623 = dma.done %s619, 128
        $region72: #{tpu_custom_call.1} parent=67 // pred_fallthru
          _
      $region68: #{tpu_custom_call.1} parent=5 // pred_fallthru
        _
    $region6: #{tpu_custom_call.1} parent=1 // loop_footer
      %s23 = sadd.s32 1, %s19
    $region7: #{tpu_custom_call.1} parent=1 // loop_footer_branch
      %18 = sbr.rel target = $region3
    $region8: #{tpu_custom_call.1} parent=1 // loop_exit
      _
    %624 = vsyncpa [#allocation3], 1
    %s625 = scalar_lea.sflag [#allocation3], 1
    %626 = vsyncpa %s625, 1
    %627 = vsyncpa [#allocation6], 1
    %628 = vsyncpa [#allocation4], 1
    %s629 = scalar_lea.sflag [#allocation4], 1
    %630 = vsyncpa %s629, 1

</llo_original>
